<compile_context>
chip_gen: v6e
topology: v6e:2x2x1
jax: 0.10.0
libtpu: 0.0.40
codegen_flags: <defaults>
</compile_context>

<pallas_src>
import functools

import jax
import jax.numpy as jnp
from jax import lax
from jax.experimental import pallas as pl
from jax.experimental.pallas import tpu as pltpu

LANES = 128
SUB = 8                      # f32 sublanes per vreg (output partial block rows)
TARGET_BLOCK_BYTES = 2 * 1024 * 1024   # ~2 MiB input block -> 4 MiB double-buffered


def _round_up(a, b):
    return ((a + b - 1) // b) * b


def _partial_sum_kernel(x_ref, out_ref, *, elem_fn, tile_rows, need_mask, tail_valid):
    x = x_ref[...].astype(jnp.float32)            # (tile_rows, 128)
    term = elem_fn(x)

    def _fold(t):
        # Fold tile_rows sublanes down to 8 -> lane-dense (8,128) partial block.
        return jnp.sum(t.reshape(tile_rows // SUB, SUB, LANES), axis=0)

    if need_mask:                                  # static: grid overhangs / lane pad exists
        last = pl.num_programs(0) - 1

        @pl.when(pl.program_id(0) == last)         # only the last tile pays for the mask
        def _():
            rows = lax.broadcasted_iota(jnp.int32, (tile_rows, LANES), 0)
            lanes = lax.broadcasted_iota(jnp.int32, (tile_rows, LANES), 1)
            local = rows * LANES + lanes           # tile-local flat index (no overflow)
            out_ref[...] = _fold(jnp.where(local < tail_valid, term, 0.0))

        @pl.when(pl.program_id(0) != last)
        def _():
            out_ref[...] = _fold(term)
    else:
        out_ref[...] = _fold(term)


def _masked_mean(x, elem_fn):
    """mean(elem_fn(x)) over all elements of x, via a lane-dense tiled reduction."""
    flat = jnp.ravel(x)                            # keep input dtype (bf16 stays bf16)
    m = flat.shape[0]

    itemsize = jnp.dtype(flat.dtype).itemsize
    sub_pack = max(SUB, 32 // itemsize)            # 8 f32 / 16 bf16 / 32 int8,fp8
    max_tile_rows = max(
        sub_pack,
        (TARGET_BLOCK_BYTES // (LANES * itemsize)) // sub_pack * sub_pack)

    rows_needed = pl.cdiv(m, LANES)
    padded_rows = max(rows_needed, sub_pack)       # tiny inputs: at least one packed block

    # Aim for >= 2 grid steps so v7x can shard the parallel axis across both
    # TensorCores; otherwise just cap at the ~2 MiB block.
    half_rows = _round_up(pl.cdiv(padded_rows, 2), sub_pack)
    tile_rows = max(sub_pack, min(max_tile_rows, half_rows))
    num_tiles = pl.cdiv(padded_rows, tile_rows)

    # Only pad to the next multiple of 128 lanes (<=127 elements) -- never to
    # the full grid extent.  The last grid block may overhang padded_rows.
    padded_m = padded_rows * LANES
    if padded_m != m:
        flat = jnp.pad(flat, (0, padded_m - m))
    x2 = flat.reshape(padded_rows, LANES)

    covered = num_tiles * tile_rows * LANES        # elements touched by the grid
    need_mask = covered != m                       # static
    tail_valid = m - (num_tiles - 1) * tile_rows * LANES   # valid elems in last tile

    kernel = functools.partial(_partial_sum_kernel, elem_fn=elem_fn,
                               tile_rows=tile_rows, need_mask=need_mask,
                               tail_valid=tail_valid)
    partials = pl.pallas_call(
        kernel,
        out_shape=jax.ShapeDtypeStruct((num_tiles * SUB, LANES), jnp.float32),
        grid_spec=pltpu.PrefetchScalarGridSpec(
            num_scalar_prefetch=0,
            grid=(num_tiles,),
            in_specs=[pl.BlockSpec((tile_rows, LANES), lambda i: (i, 0))],
            out_specs=pl.BlockSpec((SUB, LANES), lambda i: (i, 0)),
        ),
        compiler_params=pltpu.CompilerParams(
            dimension_semantics=("parallel",)),    # independent per-tile partials
    )(x2)
    return jnp.sum(partials) / m


def gan_loss(input, target_is_real, gan_type,
             real_label_val=1.0, fake_label_val=0.0, is_disc=None):
    """Pallas implementation of GANLoss(gan_type, ...)(input, target_is_real, is_disc)."""
    gan_type = gan_type.lower()

    if gan_type == 'hinge':
        if is_disc:
            sign = -1.0 if target_is_real else 1.0   # input = -input if real
            elem = lambda x: jnp.maximum(1.0 + sign * x, 0.0)   # ReLU(1+input).mean()
        else:
            elem = lambda x: -x                                  # (-input).mean()
        return _masked_mean(input, elem)

    if gan_type == 'wgan-gp':
        sign = -1.0 if target_is_real else 1.0
        return _masked_mean(input, lambda x: sign * x)

    t = float(real_label_val if target_is_real else fake_label_val)
    if gan_type == 'vanilla':
        # BCEWithLogitsLoss (numerically stable form).
        elem = lambda x: jnp.maximum(x, 0.0) - x * t + jnp.log1p(jnp.exp(-jnp.abs(x)))
    elif gan_type == 'lsgan':
        # MSELoss
        elem = lambda x: (x - t) * (x - t)
    elif gan_type in ('srpgan', 'nsgan'):
        # BCELoss (with torch's per-term log clamp at -100).  Zero-weighted log
        # terms are dropped statically (halves EUP transcendental count).
        if t == 1.0:
            elem = lambda x: -jnp.maximum(jnp.log(x), -100.0)
        elif t == 0.0:
            elem = lambda x: -jnp.maximum(jnp.log1p(-x), -100.0)
        else:
            elem = lambda x: -(t * jnp.maximum(jnp.log(x), -100.0)
                               + (1.0 - t) * jnp.maximum(jnp.log1p(-x), -100.0))
    else:
        raise NotImplementedError('GAN type [{:s}] is not found'.format(gan_type))
    return _masked_mean(input, elem)


# ---------------- pure-JAX reference (for correctness check) ----------------
def _ref_gan_loss(x, target_is_real, gan_type,
                  real_label_val=1.0, fake_label_val=0.0, is_disc=None):
    gan_type = gan_type.lower()
    x = x.astype(jnp.float32)
    if gan_type == 'hinge':
        if is_disc:
            xi = -x if target_is_real else x
            return jnp.mean(jnp.maximum(1.0 + xi, 0.0))
        return jnp.mean(-x)
    if gan_type == 'wgan-gp':
        return -jnp.mean(x) if target_is_real else jnp.mean(x)
    t = float(real_label_val if target_is_real else fake_label_val)
    if gan_type == 'vanilla':
        return jnp.mean(jnp.maximum(x, 0.0) - x * t + jnp.log1p(jnp.exp(-jnp.abs(x))))
    if gan_type == 'lsgan':
        return jnp.mean((x - t) ** 2)
    if gan_type in ('srpgan', 'nsgan'):
        return jnp.mean(-(t * jnp.maximum(jnp.log(x), -100.0)
                          + (1.0 - t) * jnp.maximum(jnp.log1p(-x), -100.0)))
    raise NotImplementedError(gan_type)


if __name__ == "__main__":
    key = jax.random.PRNGKey(0)
    k1, k2, k3, k4 = jax.random.split(key, 4)
    shape = (2, 4, 16, 16)                       # discriminator output map (NCHW)
    logits = jax.random.normal(k1, shape, dtype=jnp.float32)
    probs = jax.random.uniform(k2, shape, dtype=jnp.float32,
                               minval=1e-3, maxval=1.0 - 1e-3)
    # Odd-sized inputs (element count not a multiple of 128) exercise the
    # last-tile overhang/mask path.
    odd_shape = (2, 3, 15, 17)
    logits_odd = jax.random.normal(k3, odd_shape, dtype=jnp.float32)
    probs_odd = jax.random.uniform(k4, odd_shape, dtype=jnp.float32,
                                   minval=1e-3, maxval=1.0 - 1e-3)

    cases = [
        ('vanilla', logits, True,  None),
        ('vanilla', logits, False, None),
        ('lsgan',   logits, True,  None),
        ('lsgan',   logits, False, None),
        ('nsgan',   probs,  True,  None),
        ('srpgan',  probs,  False, None),
        ('hinge',   logits, True,  True),   # discriminator, real
        ('hinge',   logits, False, True),   # discriminator, fake
        ('hinge',   logits, True,  False),  # generator
        ('wgan-gp', logits, True,  None),
        ('wgan-gp', logits, False, None),
        ('vanilla', logits_odd, True,  None),   # overhang/mask path
        ('lsgan',   logits_odd, False, None),
        ('nsgan',   probs_odd,  True,  None),
    ]
    for gan_type, x, real, is_disc in cases:
        out = jax.block_until_ready(gan_loss(x, real, gan_type, is_disc=is_disc))
        ref = jax.block_until_ready(_ref_gan_loss(x, real, gan_type, is_disc=is_disc))
        assert jnp.allclose(out, ref, atol=1e-5, rtol=1e-5), (gan_type, real, is_disc, out, ref)
    print("KERNEL_OK")
</pallas_src>

<mosaic_0001>
module attributes {stable_mosaic.version = 11 : i64} {
  func.func @_partial_sum_kernel(%arg0: i32, %arg1: memref<8x128xf32, #tpu.memory_space<vmem>>, %arg2: memref<8x128xf32, #tpu.memory_space<vmem>>) attributes {dimension_semantics = [#tpu.dimension_semantics<parallel>], iteration_bounds = array<i64: 2>, scalar_prefetch = 0 : i64, scratch_operands = 0 : i64, tpu.core_type = #tpu.core_type<tc>, window_params = [{transform_indices = @transform_0, window_bounds = array<i64: 8, 128>}, {transform_indices = @transform_1, window_bounds = array<i64: 8, 128>}]} {
    %c0 = arith.constant 0 : index
    %c0_0 = arith.constant 0 : index
    %0 = vector.load %arg1[%c0, %c0_0] : memref<8x128xf32, #tpu.memory_space<vmem>>, vector<8x128xf32>
    %cst = arith.constant 0.000000e+00 : f32
    %1 = vector.broadcast %cst : f32 to vector<8x128xf32>
    %2 = arith.maximumf %0, %1 : vector<8x128xf32>
    %cst_1 = arith.constant 1.000000e+00 : f32
    %3 = vector.broadcast %cst_1 : f32 to vector<8x128xf32>
    %4 = arith.mulf %0, %3 : vector<8x128xf32>
    %5 = arith.subf %2, %4 : vector<8x128xf32>
    %6 = math.absf %0 : vector<8x128xf32>
    %cst_2 = arith.constant 0.000000e+00 : f32
    %7 = vector.broadcast %cst_2 : f32 to vector<8x128xf32>
    %8 = arith.subf %7, %6 : vector<8x128xf32>
    %9 = math.exp %8 : vector<8x128xf32>
    %10 = math.log1p %9 : vector<8x128xf32>
    %11 = arith.addf %5, %10 : vector<8x128xf32>
    %12 = vector.shape_cast %11 : vector<8x128xf32> to vector<1x8x128xf32>
    %cst_3 = arith.constant dense<0.000000e+00> : vector<8x128xf32>
    %13 = vector.multi_reduction <add>, %12, %cst_3 [0] : vector<1x8x128xf32> to vector<8x128xf32>
    %c0_4 = arith.constant 0 : index
    %c0_5 = arith.constant 0 : index
    %14 = vector.load %arg2[%c0_4, %c0_5] : memref<8x128xf32, #tpu.memory_space<vmem>>, vector<8x128xf32>
    tpu.vector_store %arg2[%c0_4, %c0_5], %13 {strides = array<i32>} : memref<8x128xf32, #tpu.memory_space<vmem>>, vector<8x128xf32>,
    return
  }
  func.func @transform_0(%arg0: i32) -> (i32, i32) {
    %c0_i32 = arith.constant 0 : i32
    %c0_i32_0 = arith.constant 0 : i32
    return %arg0, %c0_i32 : i32, i32
  }
  func.func @transform_1(%arg0: i32) -> (i32, i32) {
    %c0_i32 = arith.constant 0 : i32
    %c0_i32_0 = arith.constant 0 : i32
    return %arg0, %c0_i32 : i32, i32
  }
}

</mosaic_0001>

<llo_original>
// kernel: tpu_custom_call.1
$region0: #{tpu_custom_call.1}
  #allocation0 [shape = 'u32[]', space=smem, size = 0x4, offset = 0x4, fixed_abs, tag = 'smem constant byte address 0x4 - core index']
  #allocation1 [shape = 'u32[144,128]{1,0:T(1,128)}', space=vmem, size = 0x12000, scoped, tag = 'internal scratch']
  %s0 = inlined_call_operand.hbm [shape: f32[16,128], index: 0, kind: input, shape index: {}]
  %s1 = inlined_call_operand.hbm [shape: f32[16,128], index: 1, kind: output, shape index: {}]
  %s2 = sld [smem:[#allocation0]]
  $region41: #{tpu_custom_call.1} parent=0
    _
  %s4 = ssub.s32 1, %s2
  %s5 = scalar_select 0, %s4, %s2
  $region1: #{tpu_custom_call.1} parent=0
    #allocation2 [shape = 'u8[8192]{0}', space=vmem, size = 0x2000, scoped, tag = 'input window, operand 0']
    #allocation3 [shape = 's32[2]{0}', space=sflag, size = 0x8, scoped, tag = 'scoped memory for tpu_custom_call.1']
    #allocation4 [shape = 's32[2]{0}', space=sflag, size = 0x8, scoped, tag = 'scoped memory for tpu_custom_call.1']
    #allocation5 [shape = 'u8[8192]{0}', space=vmem, size = 0x2000, scoped, tag = 'output window, operand 0']
    %6 = vsyncpa [#allocation3], 0
    %s7 = scalar_lea.sflag [#allocation3], 1
    %8 = vsyncpa %s7, 0
    %9 = vsyncpa [#allocation4], 0
    %s10 = scalar_lea.sflag [#allocation4], 1
    %11 = vsyncpa %s10, 0
    loop: start=0, step=1, limit=4
    $region2: #{tpu_custom_call.1} parent=1 // loop_pre_header
      _
    $region3: #{tpu_custom_call.1} parent=1 // loop_header
      %s13 = sphi 0, %s17
      %p14 = scmp.ge.s32.totalorder %s13, 4
      %s23 = sphi 0, %s25
      %s26 = sphi 0, %s23
      %s27 = sphi 0, %s26
      %s43 = sphi 0, %s27
      %s49 = sphi 0, %s51
      %s52 = sphi 0, %s49
      %s53 = sphi 0, %s52
      %s69 = sphi 0, %s53
    $region4: #{tpu_custom_call.1} parent=1 // loop_header_branch
      %16 = sbr.rel (%p14) target = $region8
    $region5: #{tpu_custom_call.1} parent=1 // loop_body
      %s18 = ssub.s32 %s13, 1
      %s19 = ssub.s32 %s13, 2
      %s20 = sadd.s32 %s13, 1
      %s21 = ssub.s32 %s13, %s20
      %p22 = scmp.eq.s32.totalorder %s21, 0
      %s24 = sadd.s32 %s23, 1
      %s25 = scalar_select %p22, %s23, %s24
      %p28 = pneg %p22
      %p29 = scmp.eq.s32.totalorder %s13, 1
      %p30 = por %p28, %p29
      %p31 = scmp.ne.s32.totalorder %s23, %s26
      %p32 = scmp.eq.s32.totalorder %s13, 0
      %p33 = por %p31, %p32
      %p34 = scmp.ne.s32.totalorder %s23, %s26
      %p35 = scmp.eq.s32.totalorder %s18, 1
      %p36 = por %p34, %p35
      %p37 = scmp.ne.s32.totalorder %s26, %s27
      %p38 = scmp.eq.s32.totalorder %s18, 0
      %p39 = por %p37, %p38
      %p40 = scmp.ne.s32.totalorder %s26, %s27
      %p41 = scmp.eq.s32.totalorder %s19, 1
      %p42 = por %p40, %p41
      %p44 = scmp.ne.s32.totalorder %s27, %s43
      %p45 = scmp.eq.s32.totalorder %s19, 0
      %p46 = por %p44, %p45
      %s47 = ssub.s32 %s13, %s20
      %p48 = scmp.eq.s32.totalorder %s47, 0
      %s50 = sadd.s32 %s49, 1
      %s51 = scalar_select %p48, %s49, %s50
      %p54 = pneg %p48
      %p55 = scmp.eq.s32.totalorder %s13, 1
      %p56 = por %p54, %p55
      %p57 = scmp.ne.s32.totalorder %s49, %s52
      %p58 = scmp.eq.s32.totalorder %s13, 0
      %p59 = por %p57, %p58
      %p60 = scmp.ne.s32.totalorder %s49, %s52
      %p61 = scmp.eq.s32.totalorder %s18, 1
      %p62 = por %p60, %p61
      %p63 = scmp.ne.s32.totalorder %s52, %s53
      %p64 = scmp.eq.s32.totalorder %s18, 0
      %p65 = por %p63, %p64
      %p66 = scmp.ne.s32.totalorder %s52, %s53
      %p67 = scmp.eq.s32.totalorder %s19, 1
      %p68 = por %p66, %p67
      %p70 = scmp.ne.s32.totalorder %s53, %s69
      %p71 = scmp.eq.s32.totalorder %s19, 0
      %p72 = por %p70, %p71
      %p73 = scmp.le.s32.totalorder 1, %s13
      %p74 = scmp.lt.s32.totalorder %s13, 3
      %p75 = pnand %p73, %p74
      %p76 = pneg %p75
      // Predicated region
      $region9: #{tpu_custom_call.1} parent=5 // pred_check
        _
      $region10: #{tpu_custom_call.1} parent=5 // pred_check_branch
        %78 = sbr.rel (%p75) target = $region12
      $region11: #{tpu_custom_call.1} parent=5 // pred_region
        %s79 = ssub.s32 %s13, 1
      $region12: #{tpu_custom_call.1} parent=5 // pred_fallthru
        _
      %p80 = scmp.lt.s32.totalorder %s13, 2
      // Predicated region
      $region13: #{tpu_custom_call.1} parent=5 // pred_check
        %p81 = pneg %p80
      $region14: #{tpu_custom_call.1} parent=5 // pred_check_branch
        %83 = sbr.rel (%p81) target = $region16
      $region15: #{tpu_custom_call.1} parent=5 // pred_region
        // Predicated region
        $region17: #{tpu_custom_call.1} parent=15 // pred_check
          %p84 = pneg %p33
        $region18: #{tpu_custom_call.1} parent=15 // pred_check_branch
          %86 = sbr.rel (%p84) target = $region20
        $region19: #{tpu_custom_call.1} parent=15 // pred_region
          %s87 = sand.u32 %s23, 1
          %s88 = scalar_lea.sflag [#allocation3], %s87
          %s89 = sand.u32 %s23, 1
          %s90 = smul.addr %s89, 8
          %s91 = scalar_lea.vmem [#allocation2], %s90
          %s93 = ssub.s32 128, 128
          %94 = vsyncadd %s88, %s93
          %s95 = smul.addr %s13, 128
          %s96 = scalar_lea.hbm %s0, %s95
          %s98 = sshll.u32 %s91, 4
          %s99 = int_to_ptr.vmem [resolvable:$true] %s98
          %101 = dma.hbm_to_vmem [thread:$0]  %s96, 128, %s99, %s88
        $region20: #{tpu_custom_call.1} parent=15 // pred_fallthru
          _
      $region16: #{tpu_custom_call.1} parent=5 // pred_fallthru
        _
      %p102 = scmp.le.s32.totalorder 1, %s13
      %p103 = scmp.lt.s32.totalorder %s13, 3
      %p104 = pnand %p102, %p103
      %p105 = pneg %p104
      // Predicated region
      $region21: #{tpu_custom_call.1} parent=5 // pred_check
        _
      $region22: #{tpu_custom_call.1} parent=5 // pred_check_branch
        %107 = sbr.rel (%p104) target = $region24
      $region23: #{tpu_custom_call.1} parent=5 // pred_region
        %s108 = ssub.s32 %s13, 1
        %s109 = sand.u32 %s26, 1
        %s110 = scalar_lea.sflag [#allocation3], %s109
        %s111 = sand.u32 %s26, 1
        %s112 = smul.addr %s111, 8
        %s113 = scalar_lea.vmem [#allocation2], %s112
        // Predicated region
        $region25: #{tpu_custom_call.1} parent=23 // pred_check
          %p114 = pneg %p39
        $region26: #{tpu_custom_call.1} parent=23 // pred_check_branch
          %116 = sbr.rel (%p114) target = $region28
        $region27: #{tpu_custom_call.1} parent=23 // pred_region
          %117 = dma.done %s110, 128
        $region28: #{tpu_custom_call.1} parent=23 // pred_fallthru
          _
        %s118 = sand.u32 %s26, 1
        %s119 = scalar_lea.sflag [#allocation3], %s118
        %s120 = sand.u32 %s26, 1
        %s121 = smul.addr %s120, 8
        %s122 = scalar_lea.vmem [#allocation2], %s121
        %p123 = pneg %p39
        %p124 = pneg %p36
        %p125 = pneg %p65
        %p126 = pneg %p62
        %s127 = sand.u32 %s52, 1
        %s128 = scalar_lea.sflag [#allocation4], %s127
        %s129 = sand.u32 %s52, 1
        %s130 = smul.addr %s129, 8
        %s131 = scalar_lea.vmem [#allocation5], %s130
        %v132 = vld [vmem:[%s113] sm:$0xff]
        %v133 = vmax.f32 %v132, 0.0
        %v134 = vsub.f32 %v133, %v132
        %v135 = vand.u32 2147483647, %v132
        %v136 = vsub.f32 0.0, %v135
        %v137 = vmul.f32 %v136, 1.442695
        %v138 = vpow.pop %v137
        %v139 = vadd.f32 %v138, 1.0
        %v140 = vlog2.pop %v139
        %v141 = vmul.f32 %v140, 0.6931472
        %v142 = vmul.f32 -0.5, %v138
        %v143 = vadd.f32 %v142, 1.0
        %v144 = vmul.f32 %v143, %v138
        %v145 = vand.u32 2147483647, %v138
        %vm146 = vcmp.lt.f32.partialorder %v145, 0.0004427343
        %v147 = vsel %vm146, %v144, %v141
        %v148 = vadd.f32 %v134, %v147
        %v149 = vadd.f32 %v148, 0.0
        %150 = vst [vmem:[%s131] sm:$0xff] %v149
        %s151 = sand.u32 %s52, 1
        %s152 = scalar_lea.sflag [#allocation4], %s151
        %s153 = sand.u32 %s52, 1
        %s154 = smul.addr %s153, 8
        %s155 = scalar_lea.vmem [#allocation5], %s154
        // Predicated region
        $region29: #{tpu_custom_call.1} parent=23 // pred_check
          %p156 = pneg %p62
        $region30: #{tpu_custom_call.1} parent=23 // pred_check_branch
          %158 = sbr.rel (%p156) target = $region32
        $region31: #{tpu_custom_call.1} parent=23 // pred_region
          %s160 = ssub.s32 128, 128
          %161 = vsyncadd %s152, %s160
          %s162 = smul.addr %s18, 128
          %s163 = scalar_lea.hbm %s1, %s162
          %s165 = sshll.u32 %s155, 4
          %s166 = int_to_ptr.vmem [resolvable:$true] %s165
          %168 = dma.vmem_to_hbm [thread:$0]  %s166, 128, %s163, %s152
        $region32: #{tpu_custom_call.1} parent=23 // pred_fallthru
          _
      $region24: #{tpu_custom_call.1} parent=5 // pred_fallthru
        _
      %p169 = scmp.le.s32.totalorder 2, %s13
      // Predicated region
      $region33: #{tpu_custom_call.1} parent=5 // pred_check
        %p170 = pneg %p169
      $region34: #{tpu_custom_call.1} parent=5 // pred_check_branch
        %172 = sbr.rel (%p170) target = $region36
      $region35: #{tpu_custom_call.1} parent=5 // pred_region
        %s173 = ssub.s32 %s13, 2
        // Predicated region
        $region37: #{tpu_custom_call.1} parent=35 // pred_check
          %p174 = pneg %p68
        $region38: #{tpu_custom_call.1} parent=35 // pred_check_branch
          %176 = sbr.rel (%p174) target = $region40
        $region39: #{tpu_custom_call.1} parent=35 // pred_region
          %s177 = sand.u32 %s53, 1
          %s178 = scalar_lea.sflag [#allocation4], %s177
          %s179 = sand.u32 %s53, 1
          %s180 = smul.addr %s179, 8
          %s181 = scalar_lea.vmem [#allocation5], %s180
          %182 = dma.done %s178, 128
        $region40: #{tpu_custom_call.1} parent=35 // pred_fallthru
          _
      $region36: #{tpu_custom_call.1} parent=5 // pred_fallthru
        _
    $region6: #{tpu_custom_call.1} parent=1 // loop_footer
      %s17 = sadd.s32 1, %s13
    $region7: #{tpu_custom_call.1} parent=1 // loop_footer_branch
      %12 = sbr.rel target = $region3
    $region8: #{tpu_custom_call.1} parent=1 // loop_exit
      _
    %183 = vsyncpa [#allocation3], 1
    %s184 = scalar_lea.sflag [#allocation3], 1
    %185 = vsyncpa %s184, 1
    %186 = vsyncpa [#allocation4], 1
    %s187 = scalar_lea.sflag [#allocation4], 1
    %188 = vsyncpa %s187, 1

</llo_original>
